<compile_context>
chip_gen: v7x
topology: tpu7x:2x2x1
jax: 0.10.0
libtpu: 0.0.40
codegen_flags: <defaults>
</compile_context>

<pallas_src>
import numpy as np
import jax
import jax.numpy as jnp
from jax import lax
from jax.experimental import pallas as pl
from jax.experimental.pallas import tpu as pltpu


def _make_flash_kernel(n_cols_true, needs_col_mask):
    """Online-logsumexp kernel over pre-normalized, pre-scaled operands.

    `n_cols_true` / `needs_col_mask` are static Python values baked into the
    trace (no closure-captured jax arrays).
    """

    def kernel(h1s_ref, diag_ref, h2n_ref, out_ref, m_sc, l_sc):
        # h1s_ref  : (tm, C) mxu dtype  -- temp * normalize(h1), row block i (resident)
        # diag_ref : (tm, 1) f32        -- precomputed label term logits[i, i]
        # h2n_ref  : (tn, C) mxu dtype  -- normalize(h2), column block j (streamed)
        # out_ref  : (tm, 1) f32        -- per-row loss, written at the last j
        # m_sc/l_sc: (tm, 1) f32        -- running max / running sum-exp
        j = pl.program_id(1)

        @pl.when(j == 0)
        def _init():
            m_sc[...] = jnp.full(m_sc.shape, -jnp.inf, dtype=jnp.float32)
            l_sc[...] = jnp.zeros(l_sc.shape, dtype=jnp.float32)

        # logits block: contract last dims of both operands (no physical
        # transpose); bf16/f32 operands, f32 MXU accumulation.
        s = lax.dot_general(h1s_ref[...], h2n_ref[...],
                            dimension_numbers=(((1,), (1,)), ((), ())),
                            preferred_element_type=jnp.float32)

        if needs_col_mask:
            tn = s.shape[1]
            col = j * tn + lax.broadcasted_iota(jnp.int32, s.shape, 1)
            s = jnp.where(col < n_cols_true, s, -jnp.inf)

        # online log-sum-exp update (all elementwise math in f32).
        m_prev = m_sc[...]
        m_new = jnp.maximum(m_prev, jnp.max(s, axis=1, keepdims=True))
        alpha = jnp.exp(m_prev - m_new)
        l_sc[...] = alpha * l_sc[...] + jnp.sum(jnp.exp(s - m_new), axis=1,
                                                keepdims=True)
        m_sc[...] = m_new

        @pl.when(j == pl.num_programs(1) - 1)
        def _finalize():
            # loss_i = logsumexp_i(logits) - logits[i, i]
            out_ref[...] = (m_sc[...] + jnp.log(l_sc[...])) - diag_ref[...]

    return kernel


def _squeeze_trailing(x):
    # torch's .squeeze() intent, but only trailing singleton dims are dropped
    # so the batch dim survives even when N == 1.
    while x.ndim > 2 and x.shape[-1] == 1:
        x = x[..., 0]
    return x


def _round_up(x, m):
    return ((x + m - 1) // m) * m


def _choose_tile(n, target):
    """Tile size (multiple of 8, <= target) and the padded extent it implies."""
    target = max(8, (target // 8) * 8)
    if n <= target:
        t = _round_up(n, 8)
        return t, t
    return target, _round_up(n, target)


def _vmem_limit_bytes(tm, tn, c, mxu_dtype):
    item = jnp.dtype(mxu_dtype).itemsize
    streams = 2 * (tm + tn) * c * item      # double-buffered input tiles
    temps = 3 * tm * tn * 4                 # s / exp / mask f32 temporaries
    small = 8 * tm * 128 * 4                # (tm,1) buffers lane-pad to 128
    est = streams + temps + small
    # 2x headroom, floor 32 MiB, cap 64 MiB so the same config is legal on v7x.
    return int(min(max(2 * est, 32 * 1024 * 1024), 64 * 1024 * 1024))


def contrastive_loss(h1, h2, logit_scale, *, mxu_dtype=jnp.bfloat16,
                     block_rows=512, block_cols=1024):
    """Forward of ContrastiveLoss. h1, h2: (N, C[,1,1...]); logit_scale: (1,)."""
    # TODO(synk): torch.distributed all-gather (SyncFunction) has no single-chip
    # equivalent; the single-process (no gather) path is implemented.
    h1 = _squeeze_trailing(h1)
    h2 = _squeeze_trailing(h2)
    n, c = h1.shape

    # ---- plain-JAX pre-pass: normalize, fold temperature, diagonal term ----
    temp = jnp.minimum(jnp.exp(logit_scale.astype(jnp.float32)),
                       jnp.float32(100.0)).reshape(())
    h1f = h1.astype(jnp.float32)
    h2f = h2.astype(jnp.float32)
    eps2 = 1e-24  # (F.normalize eps)^2
    h1n = h1f * lax.rsqrt(jnp.maximum(jnp.sum(h1f * h1f, axis=1, keepdims=True), eps2))
    h2n = h2f * lax.rsqrt(jnp.maximum(jnp.sum(h2f * h2f, axis=1, keepdims=True), eps2))
    diag = jnp.sum(h1n * h2n, axis=1, keepdims=True) * temp           # (N, 1) f32
    h1s = (h1n * temp).astype(mxu_dtype)   # temperature folded into resident LHS
    h2n = h2n.astype(mxu_dtype)

    # ---- tiling + padding (never fall back to a single full-N block) ----
    tm, n_rows = _choose_tile(n, block_rows)
    tn, n_cols = _choose_tile(n, block_cols)
    if n_rows > n:
        h1s = jnp.pad(h1s, ((0, n_rows - n), (0, 0)))
        diag = jnp.pad(diag, ((0, n_rows - n), (0, 0)))
    if n_cols > n:
        h2n = jnp.pad(h2n, ((0, n_cols - n), (0, 0)))
    grid = (n_rows // tm, n_cols // tn)

    per_row = pl.pallas_call(
        _make_flash_kernel(n_cols_true=n, needs_col_mask=(n_cols > n)),
        out_shape=jax.ShapeDtypeStruct((n_rows, 1), jnp.float32),
        grid_spec=pltpu.PrefetchScalarGridSpec(
            num_scalar_prefetch=0,
            grid=grid,
            in_specs=[
                pl.BlockSpec((tm, c), lambda i, j: (i, 0)),   # temp*normalize(h1)
                pl.BlockSpec((tm, 1), lambda i, j: (i, 0)),   # diagonal term
                pl.BlockSpec((tn, c), lambda i, j: (j, 0)),   # normalize(h2) stream
            ],
            out_specs=pl.BlockSpec((tm, 1), lambda i, j: (i, 0)),
            scratch_shapes=[
                pltpu.VMEM((tm, 1), jnp.float32),   # running max
                pltpu.VMEM((tm, 1), jnp.float32),   # running sum-exp
            ]),
        compiler_params=pltpu.CompilerParams(
            dimension_semantics=("parallel", "arbitrary"),
            vmem_limit_bytes=_vmem_limit_bytes(tm, tn, c, mxu_dtype)),
    )(h1s, diag, h2n)

    # mean over the true (unpadded) rows -- tiny plain-JAX glue.
    return jnp.sum(per_row[:n, 0]) / jnp.float32(n)


def _reference(h1, h2, logit_scale):
    """Pure-JAX reference matching the PyTorch forward."""
    temp = jnp.minimum(jnp.exp(logit_scale), 100.0)
    h1 = jnp.squeeze(h1)
    h2 = jnp.squeeze(h2)
    h1n = h1 / jnp.maximum(jnp.linalg.norm(h1, axis=1, keepdims=True), 1e-12)
    h2n = h2 / jnp.maximum(jnp.linalg.norm(h2, axis=1, keepdims=True), 1e-12)
    logits = jnp.einsum("nc,mc->nm", h1n, h2n) * temp
    n = logits.shape[0]
    logp = jax.nn.log_softmax(logits, axis=-1)
    return -jnp.mean(logp[jnp.arange(n), jnp.arange(n)])


if __name__ == "__main__":
    key = jax.random.PRNGKey(0)
    k1, k2, k3, k4 = jax.random.split(key, 4)

    # logit_scale init exactly as in the module: log(1 / temperature), temp = 0.2
    logit_scale = jnp.array([np.log(1.0 / 0.2)], dtype=jnp.float32)

    # --- small batch of embeddings, single-block grid ---
    N, C = 8, 32
    h1 = jax.random.normal(k1, (N, C), dtype=jnp.float32)
    h2 = jax.random.normal(k2, (N, C), dtype=jnp.float32)
    ref = jax.block_until_ready(_reference(h1, h2, logit_scale))

    # default: bf16 MXU operands, f32 accumulation / softmax math
    loss_bf16 = jax.block_until_ready(contrastive_loss(h1, h2, logit_scale))
    assert np.allclose(np.asarray(loss_bf16), np.asarray(ref),
                       rtol=5e-2, atol=5e-2), (loss_bf16, ref)

    # f32 MXU operands: tight match to the f32 reference
    loss_f32 = jax.block_until_ready(
        contrastive_loss(h1, h2, logit_scale, mxu_dtype=jnp.float32))
    assert np.allclose(np.asarray(loss_f32), np.asarray(ref),
                       rtol=1e-4, atol=1e-4), (loss_f32, ref)

    # --- N not divisible by the tile: exercises zero-padding, the in-kernel
    # column mask, and a multi-block (parallel x arbitrary) grid ---
    N2 = 12
    h1b = jax.random.normal(k3, (N2, C, 1), dtype=jnp.float32)  # trailing dim, like .squeeze()
    h2b = jax.random.normal(k4, (N2, C, 1), dtype=jnp.float32)
    ref2 = jax.block_until_ready(_reference(h1b, h2b, logit_scale))
    loss2 = jax.block_until_ready(
        contrastive_loss(h1b, h2b, logit_scale, mxu_dtype=jnp.float32,
                         block_rows=8, block_cols=8))
    assert np.allclose(np.asarray(loss2), np.asarray(ref2),
                       rtol=1e-4, atol=1e-4), (loss2, ref2)

    print("KERNEL_OK")
</pallas_src>

<mosaic_0001>
module attributes {stable_mosaic.version = 11 : i64} {
  func.func @kernel(%arg0: i32, %arg1: i32, %arg2: memref<8x32xbf16, #tpu.memory_space<vmem>>, %arg3: memref<8x1xf32, #tpu.memory_space<vmem>>, %arg4: memref<8x32xbf16, #tpu.memory_space<vmem>>, %arg5: memref<8x1xf32, #tpu.memory_space<vmem>>, %arg6: memref<8x1xf32, #tpu.memory_space<vmem>>, %arg7: memref<8x1xf32, #tpu.memory_space<vmem>>) attributes {dimension_semantics = [#tpu.dimension_semantics<parallel>, #tpu.dimension_semantics<arbitrary>], iteration_bounds = array<i64: 1, 1>, scalar_prefetch = 0 : i64, scratch_operands = 2 : i64, tpu.core_type = #tpu.core_type<tc>, window_params = [{transform_indices = @transform_0, window_bounds = array<i64: 8, 32>}, {transform_indices = @transform_1, window_bounds = array<i64: 8, 1>}, {transform_indices = @transform_2, window_bounds = array<i64: 8, 32>}, {transform_indices = @transform_3, window_bounds = array<i64: 8, 1>}]} {
    %c0_i32 = arith.constant 0 : i32
    %0 = arith.cmpi eq, %arg1, %c0_i32 : i32
    %1 = arith.extui %0 : i1 to i32
    %c0_i32_0 = arith.constant 0 : i32
    %2 = arith.cmpi ne, %1, %c0_i32_0 : i32
    scf.if %2 {
      %cst_16 = arith.constant 0xFF800000 : f32
      %25 = vector.broadcast %cst_16 : f32 to vector<8x1xf32>
      %c0_17 = arith.constant 0 : index
      %c0_18 = arith.constant 0 : index
      %26 = vector.load %arg6[%c0_17, %c0_18] : memref<8x1xf32, #tpu.memory_space<vmem>>, vector<8x1xf32>
      tpu.vector_store %arg6[%c0_17, %c0_18], %25 {strides = array<i32>} : memref<8x1xf32, #tpu.memory_space<vmem>>, vector<8x1xf32>,
      %cst_19 = arith.constant 0.000000e+00 : f32
      %27 = vector.broadcast %cst_19 : f32 to vector<8x1xf32>
      %c0_20 = arith.constant 0 : index
      %c0_21 = arith.constant 0 : index
      %28 = vector.load %arg7[%c0_20, %c0_21] : memref<8x1xf32, #tpu.memory_space<vmem>>, vector<8x1xf32>
      tpu.vector_store %arg7[%c0_20, %c0_21], %27 {strides = array<i32>} : memref<8x1xf32, #tpu.memory_space<vmem>>, vector<8x1xf32>,
    } else {
    }
    %c0 = arith.constant 0 : index
    %c0_1 = arith.constant 0 : index
    %3 = vector.load %arg2[%c0, %c0_1] : memref<8x32xbf16, #tpu.memory_space<vmem>>, vector<8x32xbf16>
    %c0_2 = arith.constant 0 : index
    %c0_3 = arith.constant 0 : index
    %4 = vector.load %arg4[%c0_2, %c0_3] : memref<8x32xbf16, #tpu.memory_space<vmem>>, vector<8x32xbf16>
    %cst = arith.constant dense<0.000000e+00> : vector<8x8xf32>
    %5 = tpu.matmul %3, %4, %cst {dimension_numbers = #tpu.dot_dimension_numbers<[1], [1], [0], [0], [0, 0, 1, 0], [], []>} : vector<8x32xbf16>, vector<8x32xbf16>, vector<8x8xf32> -> vector<8x8xf32>
    %c0_4 = arith.constant 0 : index
    %c0_5 = arith.constant 0 : index
    %6 = vector.load %arg6[%c0_4, %c0_5] : memref<8x1xf32, #tpu.memory_space<vmem>>, vector<8x1xf32>
    %cst_6 = arith.constant dense<0xFF800000> : vector<8xf32>
    %7 = vector.multi_reduction <maximumf>, %5, %cst_6 [1] : vector<8x8xf32> to vector<8xf32>
    %8 = vector.shape_cast %7 : vector<8xf32> to vector<8x1xf32>
    %9 = arith.maximumf %6, %8 : vector<8x1xf32>
    %10 = arith.subf %6, %9 : vector<8x1xf32>
    %11 = math.exp %10 : vector<8x1xf32>
    %c0_7 = arith.constant 0 : index
    %c0_8 = arith.constant 0 : index
    %12 = vector.load %arg7[%c0_7, %c0_8] : memref<8x1xf32, #tpu.memory_space<vmem>>, vector<8x1xf32>
    %13 = arith.mulf %11, %12 : vector<8x1xf32>
    %14 = vector.broadcast %9 : vector<8x1xf32> to vector<8x8xf32>
    %15 = arith.subf %5, %14 : vector<8x8xf32>
    %16 = math.exp %15 : vector<8x8xf32>
    %cst_9 = arith.constant dense<0.000000e+00> : vector<8xf32>
    %17 = vector.multi_reduction <add>, %16, %cst_9 [1] : vector<8x8xf32> to vector<8xf32>
    %18 = vector.shape_cast %17 : vector<8xf32> to vector<8x1xf32>
    %19 = arith.addf %13, %18 : vector<8x1xf32>
    %c0_10 = arith.constant 0 : index
    %c0_11 = arith.constant 0 : index
    %20 = vector.load %arg7[%c0_10, %c0_11] : memref<8x1xf32, #tpu.memory_space<vmem>>, vector<8x1xf32>
    tpu.vector_store %arg7[%c0_10, %c0_11], %19 {strides = array<i32>} : memref<8x1xf32, #tpu.memory_space<vmem>>, vector<8x1xf32>,
    %c0_12 = arith.constant 0 : index
    %c0_13 = arith.constant 0 : index
    %21 = vector.load %arg6[%c0_12, %c0_13] : memref<8x1xf32, #tpu.memory_space<vmem>>, vector<8x1xf32>
    tpu.vector_store %arg6[%c0_12, %c0_13], %9 {strides = array<i32>} : memref<8x1xf32, #tpu.memory_space<vmem>>, vector<8x1xf32>,
    %c0_i32_14 = arith.constant 0 : i32
    %22 = arith.cmpi eq, %arg1, %c0_i32_14 : i32
    %23 = arith.extui %22 : i1 to i32
    %c0_i32_15 = arith.constant 0 : i32
    %24 = arith.cmpi ne, %23, %c0_i32_15 : i32
    scf.if %24 {
      %c0_16 = arith.constant 0 : index
      %c0_17 = arith.constant 0 : index
      %25 = vector.load %arg6[%c0_16, %c0_17] : memref<8x1xf32, #tpu.memory_space<vmem>>, vector<8x1xf32>
      %c0_18 = arith.constant 0 : index
      %c0_19 = arith.constant 0 : index
      %26 = vector.load %arg7[%c0_18, %c0_19] : memref<8x1xf32, #tpu.memory_space<vmem>>, vector<8x1xf32>
      %27 = math.log %26 : vector<8x1xf32>
      %28 = arith.addf %25, %27 : vector<8x1xf32>
      %c0_20 = arith.constant 0 : index
      %c0_21 = arith.constant 0 : index
      %29 = vector.load %arg3[%c0_20, %c0_21] : memref<8x1xf32, #tpu.memory_space<vmem>>, vector<8x1xf32>
      %30 = arith.subf %28, %29 : vector<8x1xf32>
      %c0_22 = arith.constant 0 : index
      %c0_23 = arith.constant 0 : index
      %31 = vector.load %arg5[%c0_22, %c0_23] : memref<8x1xf32, #tpu.memory_space<vmem>>, vector<8x1xf32>
      tpu.vector_store %arg5[%c0_22, %c0_23], %30 {strides = array<i32>} : memref<8x1xf32, #tpu.memory_space<vmem>>, vector<8x1xf32>,
    } else {
    }
    return
  }
  func.func @transform_0(%arg0: i32, %arg1: i32) -> (i32, i32) {
    %c0_i32 = arith.constant 0 : i32
    %c0_i32_0 = arith.constant 0 : i32
    return %arg0, %c0_i32 : i32, i32
  }
  func.func @transform_1(%arg0: i32, %arg1: i32) -> (i32, i32) {
    %c0_i32 = arith.constant 0 : i32
    %c0_i32_0 = arith.constant 0 : i32
    return %arg0, %c0_i32 : i32, i32
  }
  func.func @transform_2(%arg0: i32, %arg1: i32) -> (i32, i32) {
    %c0_i32 = arith.constant 0 : i32
    %c0_i32_0 = arith.constant 0 : i32
    return %arg1, %c0_i32 : i32, i32
  }
  func.func @transform_3(%arg0: i32, %arg1: i32) -> (i32, i32) {
    %c0_i32 = arith.constant 0 : i32
    %c0_i32_0 = arith.constant 0 : i32
    return %arg0, %c0_i32 : i32, i32
  }
}

</mosaic_0001>

<llo_original>
// kernel: tpu_custom_call.1
$region0: #{tpu_custom_call.1}
  #allocation0 [shape = 'u32[]', space=smem, size = 0x4, offset = 0x4, fixed_abs, tag = 'smem constant byte address 0x4 - core index']
  #allocation1 [shape = 'u32[144,128]{1,0:T(1,128)}', space=vmem, size = 0x12000, scoped, tag = 'internal scratch']
  #allocation2 [shape = 'f32[8,1]{1,0:T(8,128)}', space=vmem, size = 0x1000, scoped, tag = 'scratch operand']
  #allocation3 [shape = 'f32[8,1]{1,0:T(8,128)}', space=vmem, size = 0x1000, scoped, tag = 'scratch operand']
  %s0 = inlined_call_operand.vmem [shape: bf16[8,32], index: 0, kind: input, shape index: {}]
  %s1 = inlined_call_operand.vmem [shape: f32[8,1], index: 1, kind: input, shape index: {}]
  %s2 = inlined_call_operand.vmem [shape: bf16[8,32], index: 2, kind: input, shape index: {}]
  %s3 = inlined_call_operand.vmem [shape: f32[8,1], index: 3, kind: output, shape index: {}]
  %s4 = sld [smem:[#allocation0]]
  $region30: #{tpu_custom_call.1} parent=0
    _
  %s6 = ssub.s32 1, %s4
  %s7 = scalar_select 0, %s6, %s4
  // Predicated region
  $region2: #{tpu_custom_call.1} parent=0 // pred_check
    _
  $region3: #{tpu_custom_call.1} parent=0 // pred_check_branch
    %9 = sbr.rel (0) target = $region5
  $region4: #{tpu_custom_call.1} parent=0 // pred_region
    _
  $region5: #{tpu_custom_call.1} parent=0 // pred_fallthru
    _
  // Predicated region
  $region6: #{tpu_custom_call.1} parent=0 // pred_check
    _
  $region7: #{tpu_custom_call.1} parent=0 // pred_check_branch
    %11 = sbr.rel (0) target = $region9
  $region8: #{tpu_custom_call.1} parent=0 // pred_region
    _
  $region9: #{tpu_custom_call.1} parent=0 // pred_fallthru
    _
  // Predicated region
  $region10: #{tpu_custom_call.1} parent=0 // pred_check
    _
  $region11: #{tpu_custom_call.1} parent=0 // pred_check_branch
    %13 = sbr.rel (0) target = $region13
  $region12: #{tpu_custom_call.1} parent=0 // pred_region
    _
  $region13: #{tpu_custom_call.1} parent=0 // pred_fallthru
    _
  %p15 = scmp.eq.s32.totalorder 0, 0
  // Predicated region
  $region14: #{tpu_custom_call.1} parent=0 // pred_check
    %p16 = pneg %p15
  $region15: #{tpu_custom_call.1} parent=0 // pred_check_branch
    %18 = sbr.rel (%p16) target = $region17
  $region16: #{tpu_custom_call.1} parent=0 // pred_region
    %vm19 = vcmask 7168
    %20 = vst.msk [vmem:[#allocation2] sm:$0xff] %vm19, -inf
    %21 = vst.msk [vmem:[#allocation3] sm:$0xff] %vm19, 0.0
  $region17: #{tpu_custom_call.1} parent=0 // pred_fallthru
    _
  %v22 = vld [vmem:[%s0] sm:$0xf]
  %v23 = vld [vmem:[%s2] sm:$0xf]
  %vm24 = vcmask 261120
  %v26 = vsel %vm24, %v22, 0
  %v29 = vsel %vm24, %v23, 0
  %31 = vmatprep.subr.bf16.mxu0 0
  %32 = vmatpush1.bf16.xpose.msra.mxu0 %v29
  %33 = vmatprep.subr.bf16.mxu0 0
  %34 = vmatpush1.bf16.xpose.msra.mxu0 0
  %35 = vmatprep.subr.bf16.mxu0 0
  %36 = vmatpush1.bf16.xpose.msra.mxu0 0
  %37 = vmatprep.subr.bf16.mxu0 0
  %38 = vmatpush1.bf16.xpose.msra.mxu0 0
  %39 = vmatprep.subr.bf16.mxu0 0
  %40 = vmatpush1.bf16.xpose.msra.mxu0 0
  %41 = vmatprep.subr.bf16.mxu0 0
  %42 = vmatpush1.bf16.xpose.msra.mxu0 0
  %43 = vmatprep.subr.bf16.mxu0 0
  %44 = vmatpush1.bf16.xpose.msra.mxu0 0
  %45 = vmatprep.subr.bf16.mxu0 0
  %46 = vmatpush1.bf16.xpose.msra.mxu0 0
  %47 = vmatprep.subr.bf16.mxu0 0
  %48 = vmatpush1.bf16.xpose.msra.mxu0 0
  %49 = vmatprep.subr.bf16.mxu0 0
  %50 = vmatpush1.bf16.xpose.msra.mxu0 0
  %51 = vmatprep.subr.bf16.mxu0 0
  %52 = vmatpush1.bf16.xpose.msra.mxu0 0
  %53 = vmatprep.subr.bf16.mxu0 0
  %54 = vmatpush1.bf16.xpose.msra.mxu0 0
  %55 = vmatprep.subr.bf16.mxu0 0
  %56 = vmatpush1.bf16.xpose.msra.mxu0 0
  %57 = vmatprep.subr.bf16.mxu0 0
  %58 = vmatpush1.bf16.xpose.msra.mxu0 0
  %59 = vmatprep.subr.bf16.mxu0 0
  %60 = vmatpush1.bf16.xpose.msra.mxu0 0
  %61 = vmatprep.subr.bf16.mxu0 0
  %62 = vmatpush1.bf16.xpose.msra.mxu0 0
  %63 = vmatprep.mubr.bf16.mxu0 0
  %64 = vmatmul.mubr.bf16.gmra.mrb[0].mxu0 %v26
  %v65 = vpop.f32.mrb[0].mxu0
  %v66 = vadd.f32 0.0, %v65
  %v67 = vpop.f32.mrb[0].mxu0
  %v68 = vpop.f32.mrb[0].mxu0
  %v69 = vpop.f32.mrb[0].mxu0
  %70 = vdwg.mxu0
  %v71 = vld [vmem:[#allocation2] sm:$0xff]
  %vm72 = vcmask 64512
  %v73 = vsel %vm72, %v66, -inf
  %74 = vmax.xlane.f32.xlu0 %v73
  %v75 = vpop.xlane.xlu0 %74
  %v76 = vmax.f32 %v71, %v75
  %v77 = vsub.f32 %v71, %v76
  %v78 = vmul.f32 %v77, 1.442695
  %v79 = vpow.pop %v78
  %v80 = vld [vmem:[#allocation3] sm:$0xff]
  %v81 = vmul.f32 %v79, %v80
  %83 = vset.pattern.permute.xlu0 0
  %84 = vperm.xlu0 %83, %v76
  %v85 = vpop.permute.xlu0 %84
  %v87 = vsub.f32 %v66, %v85
  %v88 = vmul.f32 %v87, 1.442695
  %v89 = vpow.pop %v88
  %v90 = vsel %vm72, %v89, 0.0
  %91 = vadd.xlane.f32.xlu0 %v90
  %v92 = vpop.xlane.xlu0 %91
  %v93 = vadd.f32 %v81, %v92
  %vm94 = vcmask 7168
  %95 = vst.msk [vmem:[#allocation3] sm:$0xff] %vm94, %v93
  %96 = vst.msk [vmem:[#allocation2] sm:$0xff] %vm94, %v76
  // Predicated region
  $region18: #{tpu_custom_call.1} parent=0 // pred_check
    %p97 = pneg %p15
  $region19: #{tpu_custom_call.1} parent=0 // pred_check_branch
    %99 = sbr.rel (%p97) target = $region21
  $region20: #{tpu_custom_call.1} parent=0 // pred_region
    %v100 = vld [vmem:[#allocation2] sm:$0xff]
    %v101 = vld [vmem:[#allocation3] sm:$0xff]
    %v102 = vlog2.pop %v101
    %v103 = vmul.f32 %v102, 0.6931472
    %v104 = vadd.f32 %v100, %v103
    %v105 = vld [vmem:[%s1] sm:$0xff]
    %v106 = vsub.f32 %v104, %v105
    %107 = vst.msk [vmem:[%s3] sm:$0xff] %vm94, %v106
  $region21: #{tpu_custom_call.1} parent=0 // pred_fallthru
    _
  // Predicated region
  $region22: #{tpu_custom_call.1} parent=0 // pred_check
    _
  $region23: #{tpu_custom_call.1} parent=0 // pred_check_branch
    %109 = sbr.rel (0) target = $region25
  $region24: #{tpu_custom_call.1} parent=0 // pred_region
    _
  $region25: #{tpu_custom_call.1} parent=0 // pred_fallthru
    _
  // Predicated region
  $region26: #{tpu_custom_call.1} parent=0 // pred_check
    _
  $region27: #{tpu_custom_call.1} parent=0 // pred_check_branch
    %111 = sbr.rel (0) target = $region29
  $region28: #{tpu_custom_call.1} parent=0 // pred_region
    _
  $region29: #{tpu_custom_call.1} parent=0 // pred_fallthru
    _

</llo_original>
